<compile_context>
chip_gen: v7x
topology: tpu7x:2x2x1
jax: 0.10.0
libtpu: 0.0.40
codegen_flags: <defaults>
</compile_context>

<pallas_src>
import functools

import jax
import jax.numpy as jnp
from jax.experimental import pallas as pl
from jax.experimental.pallas import tpu as pltpu


def base_network_kernel(x_ref, w1_ref, b1_ref, w2_ref, b2_ref, o_ref):
    # Cast the x tile to the weight dtype (bf16) in-register: halves the x
    # HBM traffic compared to casting in the wrapper.
    x = x_ref[...].astype(w1_ref.dtype)
    # fc1 (bf16 MXU matmul, f32 accumulate; K=300 is unaligned -> Mosaic pads)
    h = jnp.dot(x, w1_ref[...], preferred_element_type=jnp.float32)
    # bias + ReLU in f32 (safe on all generations incl. v5e VPU)
    h = jnp.maximum(h + b1_ref[...], 0.0)
    # dropout1: identity (eval mode)
    # fc2 (cast activations back to the weight dtype for the MXU fast path)
    out = jnp.dot(h.astype(w2_ref.dtype), w2_ref[...],
                  preferred_element_type=jnp.float32)
    o_ref[...] = (out + b2_ref[...]).astype(o_ref.dtype)


def prepare_params(w1, b1, w2, b2, *, use_bf16=True):
    """One-time param prep: pre-cast weights, pre-reshape biases to (1, N)."""
    mm_dtype = jnp.bfloat16 if use_bf16 else jnp.float32
    return (w1.astype(mm_dtype),
            b1.reshape(1, -1).astype(jnp.float32),
            w2.astype(mm_dtype),
            b2.reshape(1, -1).astype(jnp.float32))


@functools.partial(jax.jit, static_argnames=("block_m",))
def base_network_forward(x, w1q, b1_2d, w2q, b2_2d, *, block_m=2048):
    """x: [B, input_dim] float32; returns [B, embedding_dim] float32.

    w1q: [input_dim, 256] (bf16), b1_2d: [1, 256] (f32),
    w2q: [256, embedding_dim] (bf16), b2_2d: [1, embedding_dim] (f32).
    """
    B, d_in = x.shape
    d_hidden = w1q.shape[1]
    d_out = w2q.shape[1]
    assert w1q.shape == (d_in, d_hidden)
    assert w2q.shape == (d_hidden, d_out)

    # Batch tile: at most block_m, a multiple of 8 sublanes, and no larger
    # than half the batch (rounded up) so v7x's two TensorCores both get a
    # grid step whenever B > 8. No batch padding: grid = cdiv(B, tm) and the
    # partial trailing block is clipped by Pallas.
    half_b = pl.cdiv(pl.cdiv(B, 2), 8) * 8
    tm = max(8, min(block_m, half_b))
    grid = (pl.cdiv(B, tm),)

    return pl.pallas_call(
        base_network_kernel,
        out_shape=jax.ShapeDtypeStruct((B, d_out), jnp.float32),
        grid_spec=pl.GridSpec(
            grid=grid,
            in_specs=[
                # batch-tiled activations (double-buffered across steps)
                pl.BlockSpec((tm, d_in), lambda i: (i, 0)),
                # weights / biases: constant index_map -> VMEM-resident
                pl.BlockSpec((d_in, d_hidden), lambda i: (0, 0)),
                pl.BlockSpec((1, d_hidden), lambda i: (0, 0)),
                pl.BlockSpec((d_hidden, d_out), lambda i: (0, 0)),
                pl.BlockSpec((1, d_out), lambda i: (0, 0)),
            ],
            out_specs=pl.BlockSpec((tm, d_out), lambda i: (i, 0)),
        ),
        compiler_params=pltpu.CompilerParams(
            # batch rows are independent -> shard across v7x's 2 TensorCores
            dimension_semantics=("parallel",),
            vmem_limit_bytes=32 << 20,
        ),
    )(x, w1q, b1_2d, w2q, b2_2d)


def init_params(key, input_dim=300, hidden_dim=256, embedding_dim=128):
    """Deterministic init matching nn.Linear shapes (weights stored transposed)."""
    k1, k2, k3, k4 = jax.random.split(key, 4)
    # PyTorch nn.Linear default: U(-1/sqrt(fan_in), 1/sqrt(fan_in))
    lim1 = 1.0 / (input_dim ** 0.5)
    lim2 = 1.0 / (hidden_dim ** 0.5)
    w1 = jax.random.uniform(k1, (input_dim, hidden_dim), jnp.float32, -lim1, lim1)
    b1 = jax.random.uniform(k2, (hidden_dim,), jnp.float32, -lim1, lim1)
    w2 = jax.random.uniform(k3, (hidden_dim, embedding_dim), jnp.float32, -lim2, lim2)
    b2 = jax.random.uniform(k4, (embedding_dim,), jnp.float32, -lim2, lim2)
    return w1, b1, w2, b2


def _reference(x, w1, b1, w2, b2, use_bf16=True):
    """Pure-JAX reference with the same bf16-input / f32-accumulate semantics."""
    if use_bf16:
        xq = x.astype(jnp.bfloat16).astype(jnp.float32)
        w1q = w1.astype(jnp.bfloat16).astype(jnp.float32)
        w2q = w2.astype(jnp.bfloat16).astype(jnp.float32)
    else:
        xq, w1q, w2q = x, w1, w2
    h = jnp.maximum(xq @ w1q + b1, 0.0)
    if use_bf16:
        h = h.astype(jnp.bfloat16).astype(jnp.float32)
    return h @ w2q + b2


if __name__ == "__main__":
    key = jax.random.PRNGKey(0)
    kx, kp, kx2 = jax.random.split(key, 3)

    INPUT_DIM, HIDDEN, EMB = 300, 256, 128
    w1, b1, w2, b2 = init_params(kp, INPUT_DIM, HIDDEN, EMB)
    w1q, b1_2d, w2q, b2_2d = prepare_params(w1, b1, w2, b2)

    # --- small batch (single grid step) ---
    B = 8
    x = jax.random.normal(kx, (B, INPUT_DIM), dtype=jnp.float32)
    out = jax.block_until_ready(base_network_forward(x, w1q, b1_2d, w2q, b2_2d))
    ref = _reference(x, w1, b1, w2, b2)
    assert out.shape == (B, EMB)
    assert jnp.allclose(out, ref, atol=1e-2, rtol=1e-2)

    # --- larger batch exercising the tiled / partial-block path (grid = 2) ---
    B2 = 500  # tm=256 -> grid=2, trailing block partial (no wrapper padding)
    x2 = jax.random.normal(kx2, (B2, INPUT_DIM), dtype=jnp.float32)
    out2 = jax.block_until_ready(base_network_forward(x2, w1q, b1_2d, w2q, b2_2d))
    ref2 = _reference(x2, w1, b1, w2, b2)
    assert out2.shape == (B2, EMB)
    assert jnp.allclose(out2, ref2, atol=1e-2, rtol=1e-2)

    print("KERNEL_OK")
</pallas_src>

<mosaic_0001>
module attributes {stable_mosaic.version = 11 : i64} {
  func.func @base_network_kernel(%arg0: i32, %arg1: memref<8x300xf32, #tpu.memory_space<vmem>>, %arg2: memref<300x256xbf16, #tpu.memory_space<vmem>>, %arg3: memref<1x256xf32, #tpu.memory_space<vmem>>, %arg4: memref<256x128xbf16, #tpu.memory_space<vmem>>, %arg5: memref<1x128xf32, #tpu.memory_space<vmem>>, %arg6: memref<8x128xf32, #tpu.memory_space<vmem>>) attributes {dimension_semantics = [#tpu.dimension_semantics<parallel>], iteration_bounds = array<i64: 1>, scalar_prefetch = 0 : i64, scratch_operands = 0 : i64, tpu.core_type = #tpu.core_type<tc>, window_params = [{transform_indices = @transform_0, window_bounds = array<i64: 8, 300>}, {pipeline_mode = #tpu.pipeline_mode<synchronous>, transform_indices = @transform_1, window_bounds = array<i64: 300, 256>}, {pipeline_mode = #tpu.pipeline_mode<synchronous>, transform_indices = @transform_2, window_bounds = array<i64: 1, 256>}, {pipeline_mode = #tpu.pipeline_mode<synchronous>, transform_indices = @transform_3, window_bounds = array<i64: 256, 128>}, {pipeline_mode = #tpu.pipeline_mode<synchronous>, transform_indices = @transform_4, window_bounds = array<i64: 1, 128>}, {transform_indices = @transform_5, window_bounds = array<i64: 8, 128>}]} {
    %c0 = arith.constant 0 : index
    %c0_0 = arith.constant 0 : index
    %0 = vector.load %arg1[%c0, %c0_0] : memref<8x300xf32, #tpu.memory_space<vmem>>, vector<8x300xf32>
    %1 = arith.truncf %0 : vector<8x300xf32> to vector<8x300xbf16>
    %c0_1 = arith.constant 0 : index
    %c0_2 = arith.constant 0 : index
    %2 = vector.load %arg2[%c0_1, %c0_2] : memref<300x256xbf16, #tpu.memory_space<vmem>>, vector<300x256xbf16>
    %cst = arith.constant dense<0.000000e+00> : vector<8x256xf32>
    %3 = tpu.matmul %1, %2, %cst {dimension_numbers = #tpu.dot_dimension_numbers<[1], [0], [0], [1], [0, 0, 1, 1], [], []>} : vector<8x300xbf16>, vector<300x256xbf16>, vector<8x256xf32> -> vector<8x256xf32>
    %c0_3 = arith.constant 0 : index
    %c0_4 = arith.constant 0 : index
    %4 = vector.load %arg3[%c0_3, %c0_4] : memref<1x256xf32, #tpu.memory_space<vmem>>, vector<1x256xf32>
    %5 = vector.broadcast %4 : vector<1x256xf32> to vector<8x256xf32>
    %6 = arith.addf %3, %5 : vector<8x256xf32>
    %cst_5 = arith.constant 0.000000e+00 : f32
    %7 = vector.broadcast %cst_5 : f32 to vector<8x256xf32>
    %8 = arith.maximumf %6, %7 : vector<8x256xf32>
    %9 = arith.truncf %8 : vector<8x256xf32> to vector<8x256xbf16>
    %c0_6 = arith.constant 0 : index
    %c0_7 = arith.constant 0 : index
    %10 = vector.load %arg4[%c0_6, %c0_7] : memref<256x128xbf16, #tpu.memory_space<vmem>>, vector<256x128xbf16>
    %cst_8 = arith.constant dense<0.000000e+00> : vector<8x128xf32>
    %11 = tpu.matmul %9, %10, %cst_8 {dimension_numbers = #tpu.dot_dimension_numbers<[1], [0], [0], [1], [0, 0, 1, 1], [], []>} : vector<8x256xbf16>, vector<256x128xbf16>, vector<8x128xf32> -> vector<8x128xf32>
    %c0_9 = arith.constant 0 : index
    %c0_10 = arith.constant 0 : index
    %12 = vector.load %arg5[%c0_9, %c0_10] : memref<1x128xf32, #tpu.memory_space<vmem>>, vector<1x128xf32>
    %13 = vector.broadcast %12 : vector<1x128xf32> to vector<8x128xf32>
    %14 = arith.addf %11, %13 : vector<8x128xf32>
    %c0_11 = arith.constant 0 : index
    %c0_12 = arith.constant 0 : index
    %15 = vector.load %arg6[%c0_11, %c0_12] : memref<8x128xf32, #tpu.memory_space<vmem>>, vector<8x128xf32>
    tpu.vector_store %arg6[%c0_11, %c0_12], %14 {strides = array<i32>} : memref<8x128xf32, #tpu.memory_space<vmem>>, vector<8x128xf32>,
    return
  }
  func.func @transform_0(%arg0: i32) -> (i32, i32) {
    %c0_i32 = arith.constant 0 : i32
    %c0_i32_0 = arith.constant 0 : i32
    return %arg0, %c0_i32 : i32, i32
  }
  func.func @transform_1(%arg0: i32) -> (i32, i32) {
    %c0_i32 = arith.constant 0 : i32
    %c0_i32_0 = arith.constant 0 : i32
    %c0_i32_1 = arith.constant 0 : i32
    return %c0_i32, %c0_i32_0 : i32, i32
  }
  func.func @transform_2(%arg0: i32) -> (i32, i32) {
    %c0_i32 = arith.constant 0 : i32
    %c0_i32_0 = arith.constant 0 : i32
    %c0_i32_1 = arith.constant 0 : i32
    return %c0_i32, %c0_i32_0 : i32, i32
  }
  func.func @transform_3(%arg0: i32) -> (i32, i32) {
    %c0_i32 = arith.constant 0 : i32
    %c0_i32_0 = arith.constant 0 : i32
    %c0_i32_1 = arith.constant 0 : i32
    return %c0_i32, %c0_i32_0 : i32, i32
  }
  func.func @transform_4(%arg0: i32) -> (i32, i32) {
    %c0_i32 = arith.constant 0 : i32
    %c0_i32_0 = arith.constant 0 : i32
    %c0_i32_1 = arith.constant 0 : i32
    return %c0_i32, %c0_i32_0 : i32, i32
  }
  func.func @transform_5(%arg0: i32) -> (i32, i32) {
    %c0_i32 = arith.constant 0 : i32
    %c0_i32_0 = arith.constant 0 : i32
    return %arg0, %c0_i32 : i32, i32
  }
}

</mosaic_0001>

<llo_original>
// kernel: base_network_forward.1
$region0: #{base_network_forward.1}
  #allocation0 [shape = 'u32[]', space=smem, size = 0x4, offset = 0x4, fixed_abs, tag = 'smem constant byte address 0x4 - core index']
  #allocation1 [shape = 'u32[144,128]{1,0:T(1,128)}', space=vmem, size = 0x12000, scoped, tag = 'internal scratch']
  %s0 = inlined_call_operand.hbm [shape: f32[8,300], index: 0, kind: input, shape index: {}]
  %s1 = inlined_call_operand.hbm [shape: bf16[300,256], index: 1, kind: input, shape index: {}]
  %s2 = inlined_call_operand.vmem [shape: f32[1,256], index: 2, kind: input, shape index: {}]
  %s3 = inlined_call_operand.hbm [shape: bf16[256,128], index: 3, kind: input, shape index: {}]
  %s4 = inlined_call_operand.vmem [shape: f32[1,128], index: 4, kind: input, shape index: {}]
  %s5 = inlined_call_operand.hbm [shape: f32[8,128], index: 5, kind: output, shape index: {}]
  %s6 = sld [smem:[#allocation0]]
  $region42: #{base_network_forward.1} parent=0
    _
  %s8 = ssub.s32 1, %s6
  %s9 = scalar_select 0, %s8, %s6
  $region1: #{base_network_forward.1} parent=0
    #allocation2 [shape = 'u8[12288]{0}', space=vmem, size = 0x3000, scoped, tag = 'input window, operand 0, single buffered']
    #allocation3 [shape = 's32[1]{0}', space=sflag, size = 0x4, scoped, tag = 'scoped memory for base_network_forward.1']
    #allocation4 [shape = 's32[1]{0}', space=sflag, size = 0x4, scoped, tag = 'scoped memory for base_network_forward.1']
    #allocation5 [shape = 'u8[155648]{0}', space=vmem, size = 0x26000, scoped, tag = 'input window, operand 1, single buffered']
    #allocation6 [shape = 's32[1]{0}', space=sflag, size = 0x4, scoped, tag = 'scoped memory for base_network_forward.1']
    #allocation7 [shape = 'u8[65536]{0}', space=vmem, size = 0x10000, scoped, tag = 'input window, operand 3, single buffered']
    #allocation8 [shape = 'u8[4096]{0}', space=vmem, size = 0x1000, scoped, tag = 'output window, operand 0, single buffered']
    %10 = vsyncpa [#allocation3], 0
    %11 = vsyncpa [#allocation6], 0
    %12 = vsyncpa [#allocation4], 0
    // Predicated region
    $region2: #{base_network_forward.1} parent=1 // pred_check
      _
    $region3: #{base_network_forward.1} parent=1 // pred_check_branch
      %14 = sbr.rel (0) target = $region5
    $region4: #{base_network_forward.1} parent=1 // pred_region
      %s16 = ssub.s32 384, 384
      %17 = vsyncadd [#allocation3], %s16
      %s19 = sshll.u32 [#allocation2], 4
      %s20 = int_to_ptr.vmem [resolvable:$true] %s19
      %22 = dma.hbm_to_vmem [thread:$0]  %s0, 384, %s20, [#allocation3]
    $region5: #{base_network_forward.1} parent=1 // pred_fallthru
      _
    // Predicated region
    $region6: #{base_network_forward.1} parent=1 // pred_check
      _
    $region7: #{base_network_forward.1} parent=1 // pred_check_branch
      %24 = sbr.rel (0) target = $region9
    $region8: #{base_network_forward.1} parent=1 // pred_region
      %s26 = ssub.s32 4864, 4864
      %27 = vsyncadd [#allocation6], %s26
      %s28 = sshll.u32 [#allocation5], 4
      %s29 = int_to_ptr.vmem [resolvable:$true] %s28
      %34 = dma.hbm_to_vmem [thread:$0]  %s1, 4864, %s29, [#allocation6], 128, 128, 8
    $region9: #{base_network_forward.1} parent=1 // pred_fallthru
      _
    // Predicated region
    $region10: #{base_network_forward.1} parent=1 // pred_check
      _
    $region11: #{base_network_forward.1} parent=1 // pred_check_branch
      %36 = sbr.rel (0) target = $region13
    $region12: #{base_network_forward.1} parent=1 // pred_region
      _
    $region13: #{base_network_forward.1} parent=1 // pred_fallthru
      _
    // Predicated region
    $region14: #{base_network_forward.1} parent=1 // pred_check
      _
    $region15: #{base_network_forward.1} parent=1 // pred_check_branch
      %38 = sbr.rel (0) target = $region17
    $region16: #{base_network_forward.1} parent=1 // pred_region
      %s40 = ssub.s32 2048, 2048
      %41 = vsyncadd [#allocation6], %s40
      %s42 = sshll.u32 [#allocation7], 4
      %s43 = int_to_ptr.vmem [resolvable:$true] %s42
      %48 = dma.hbm_to_vmem [thread:$0]  %s3, 2048, %s43, [#allocation6], 64, 64, 4
    $region17: #{base_network_forward.1} parent=1 // pred_fallthru
      _
    // Predicated region
    $region18: #{base_network_forward.1} parent=1 // pred_check
      _
    $region19: #{base_network_forward.1} parent=1 // pred_check_branch
      %50 = sbr.rel (0) target = $region21
    $region20: #{base_network_forward.1} parent=1 // pred_region
      _
    $region21: #{base_network_forward.1} parent=1 // pred_fallthru
      _
    // Predicated region
    $region22: #{base_network_forward.1} parent=1 // pred_check
      _
    $region23: #{base_network_forward.1} parent=1 // pred_check_branch
      %52 = sbr.rel (0) target = $region25
    $region24: #{base_network_forward.1} parent=1 // pred_region
      %53 = dma.done [#allocation3], 384
    $region25: #{base_network_forward.1} parent=1 // pred_fallthru
      _
    // Predicated region
    $region26: #{base_network_forward.1} parent=1 // pred_check
      _
    $region27: #{base_network_forward.1} parent=1 // pred_check_branch
      %55 = sbr.rel (0) target = $region29
    $region28: #{base_network_forward.1} parent=1 // pred_region
      %56 = dma.done [#allocation6], 4864
    $region29: #{base_network_forward.1} parent=1 // pred_fallthru
      _
    // Predicated region
    $region30: #{base_network_forward.1} parent=1 // pred_check
      _
    $region31: #{base_network_forward.1} parent=1 // pred_check_branch
      %58 = sbr.rel (0) target = $region33
    $region32: #{base_network_forward.1} parent=1 // pred_region
      %59 = dma.done [#allocation6], 2048
    $region33: #{base_network_forward.1} parent=1 // pred_fallthru
      _
    %v61 = vld [vmem:[#allocation2] sm:$0xff]
    %v62 = vld [vmem:[#allocation2 + $0x8] sm:$0xff]
    %v63 = vld [vmem:[#allocation2 + $0x10] sm:$0xff]
    %v64 = vpack.c.bf16 %v61, %v61
    %v65 = vpack.c.bf16 %v62, %v62
    %v66 = vpack.c.bf16 %v63, %v63
    %v67 = vld [vmem:[#allocation5] sm:$0xff]
    %v68 = vld [vmem:[#allocation5 + $0x8] sm:$0xff]
    %v69 = vld [vmem:[#allocation5 + $0x10] sm:$0xff]
    %v70 = vld [vmem:[#allocation5 + $0x18] sm:$0xff]
    %v71 = vld [vmem:[#allocation5 + $0x20] sm:$0xff]
    %v72 = vld [vmem:[#allocation5 + $0x28] sm:$0xff]
    %v73 = vld [vmem:[#allocation5 + $0x30] sm:$0xff]
    %v74 = vld [vmem:[#allocation5 + $0x38] sm:$0xff]
    %v75 = vld [vmem:[#allocation5 + $0x40] sm:$0xff]
    %v76 = vld [vmem:[#allocation5 + $0x48] sm:$0xff]
    %v77 = vld [vmem:[#allocation5 + $0x50] sm:$0xff]
    %v78 = vld [vmem:[#allocation5 + $0x58] sm:$0xff]
    %v79 = vld [vmem:[#allocation5 + $0x60] sm:$0xff]
    %v80 = vld [vmem:[#allocation5 + $0x68] sm:$0xff]
    %v81 = vld [vmem:[#allocation5 + $0x70] sm:$0xff]
    %v82 = vld [vmem:[#allocation5 + $0x78] sm:$0xff]
    %v83 = vld [vmem:[#allocation5 + $0x80] sm:$0xff]
    %v84 = vld [vmem:[#allocation5 + $0x88] sm:$0xff]
    %v85 = vld [vmem:[#allocation5 + $0x90] sm:$0xff]
    %v86 = vld [vmem:[#allocation5 + $0x98] sm:$0xff]
    %v87 = vld [vmem:[#allocation5 + $0xa0] sm:$0xff]
    %v88 = vld [vmem:[#allocation5 + $0xa8] sm:$0xff]
    %v89 = vld [vmem:[#allocation5 + $0xb0] sm:$0xff]
    %v90 = vld [vmem:[#allocation5 + $0xb8] sm:$0xff]
    %v91 = vld [vmem:[#allocation5 + $0xc0] sm:$0xff]
    %v92 = vld [vmem:[#allocation5 + $0xc8] sm:$0xff]
    %v93 = vld [vmem:[#allocation5 + $0xd0] sm:$0xff]
    %v94 = vld [vmem:[#allocation5 + $0xd8] sm:$0xff]
    %v95 = vld [vmem:[#allocation5 + $0xe0] sm:$0xff]
    %v96 = vld [vmem:[#allocation5 + $0xe8] sm:$0xff]
    %v97 = vld [vmem:[#allocation5 + $0xf0] sm:$0xff]
    %v98 = vld [vmem:[#allocation5 + $0xf8] sm:$0xff]
    %v99 = vld [vmem:[#allocation5 + $0x100] sm:$0xff]
    %v100 = vld [vmem:[#allocation5 + $0x108] sm:$0xff]
    %v101 = vld [vmem:[#allocation5 + $0x110] sm:$0xff]
    %v102 = vld [vmem:[#allocation5 + $0x118] sm:$0xff]
    %v103 = vld [vmem:[#allocation5 + $0x120] sm:$0xff]
    %v104 = vld [vmem:[#allocation5 + $0x128] sm:$0x33]
    %v105 = vld [vmem:[%s2] sm:$0x3]
    %v107 = vlaneseq
    %v108 = vshrl.u32 %v107, 7
    %v109 = vsub.s32 0, %v108
    %v110 = vrot.slane %v105, %v109
    %v111 = vlaneseq
    %v112 = vshrl.u32 %v111, 7
    %v113 = vsub.s32 1, %v112
    %v114 = vrot.slane %v105, %v113
    %v155 = vunpack.c.l.b16 %v67
    %v156 = vunpack.c.h.b16 %v67
    %v157 = vunpack.c.l.b16 %v68
    %v158 = vunpack.c.h.b16 %v68
    %v159 = vunpack.c.l.b16 %v69
    %v160 = vunpack.c.h.b16 %v69
    %v161 = vunpack.c.l.b16 %v70
    %v162 = vunpack.c.h.b16 %v70
    %v163 = vunpack.c.l.b16 %v71
    %v164 = vunpack.c.h.b16 %v71
    %v165 = vunpack.c.l.b16 %v72
    %v166 = vunpack.c.h.b16 %v72
    %v167 = vunpack.c.l.b16 %v73
    %v168 = vunpack.c.h.b16 %v73
    %v169 = vunpack.c.l.b16 %v74
    %v170 = vunpack.c.h.b16 %v74
    %v171 = vunpack.c.l.b16 %v75
    %v172 = vunpack.c.h.b16 %v75
    %v173 = vunpack.c.l.b16 %v76
    %v174 = vunpack.c.h.b16 %v76
    %v175 = vunpack.c.l.b16 %v77
    %v176 = vunpack.c.h.b16 %v77
    %v177 = vunpack.c.l.b16 %v78
    %v178 = vunpack.c.h.b16 %v78
    %v179 = vunpack.c.l.b16 %v79
    %v180 = vunpack.c.h.b16 %v79
    %v181 = vunpack.c.l.b16 %v80
    %v182 = vunpack.c.h.b16 %v80
    %v183 = vunpack.c.l.b16 %v81
    %v184 = vunpack.c.h.b16 %v81
    %v185 = vunpack.c.l.b16 %v82
    %v186 = vunpack.c.h.b16 %v82
    %v187 = vunpack.c.l.b16 %v83
    %v188 = vunpack.c.h.b16 %v83
    %v189 = vunpack.c.l.b16 %v84
    %v190 = vunpack.c.h.b16 %v84
    %v191 = vunpack.c.l.b16 %v85
    %v192 = vunpack.c.h.b16 %v85
    %v193 = vunpack.c.l.b16 %v86
    %v194 = vunpack.c.h.b16 %v86
    %v195 = vunpack.c.l.b16 %v87
    %v196 = vunpack.c.h.b16 %v87
    %v197 = vunpack.c.l.b16 %v88
    %v198 = vunpack.c.h.b16 %v88
    %v199 = vunpack.c.l.b16 %v89
    %v200 = vunpack.c.h.b16 %v89
    %v201 = vunpack.c.l.b16 %v90
    %v202 = vunpack.c.h.b16 %v90
    %v203 = vunpack.c.l.b16 %v91
    %v204 = vunpack.c.h.b16 %v91
    %v205 = vunpack.c.l.b16 %v92
    %v206 = vunpack.c.h.b16 %v92
    %v207 = vunpack.c.l.b16 %v93
    %v208 = vunpack.c.h.b16 %v93
    %v209 = vunpack.c.l.b16 %v94
    %v210 = vunpack.c.h.b16 %v94
    %v211 = vunpack.c.l.b16 %v95
    %v212 = vunpack.c.h.b16 %v95
    %v213 = vunpack.c.l.b16 %v96
    %v214 = vunpack.c.h.b16 %v96
    %v215 = vunpack.c.l.b16 %v97
    %v216 = vunpack.c.h.b16 %v97
    %v217 = vunpack.c.l.b16 %v98
    %v218 = vunpack.c.h.b16 %v98
    %v219 = vunpack.c.l.b16 %v99
    %v220 = vunpack.c.h.b16 %v99
    %v221 = vunpack.c.l.b16 %v100
    %v222 = vunpack.c.h.b16 %v100
    %v223 = vunpack.c.l.b16 %v101
    %v224 = vunpack.c.h.b16 %v101
    %v225 = vunpack.c.l.b16 %v102
    %v226 = vunpack.c.h.b16 %v102
    %v227 = vunpack.c.l.b16 %v103
    %v228 = vunpack.c.h.b16 %v103
    %v229 = vunpack.c.l.b16 %v104
    %v230 = vunpack.c.h.b16 %v104
    %v231 = vpack.c.b16 %v157, %v155
    %v232 = vpack.c.b16 %v158, %v156
    %v233 = vpack.c.b16 %v161, %v159
    %v234 = vpack.c.b16 %v162, %v160
    %v235 = vpack.c.b16 %v165, %v163
    %v236 = vpack.c.b16 %v166, %v164
    %v237 = vpack.c.b16 %v169, %v167
    %v238 = vpack.c.b16 %v170, %v168
    %v239 = vpack.c.b16 %v173, %v171
    %v240 = vpack.c.b16 %v174, %v172
    %v241 = vpack.c.b16 %v177, %v175
    %v242 = vpack.c.b16 %v178, %v176
    %v243 = vpack.c.b16 %v181, %v179
    %v244 = vpack.c.b16 %v182, %v180
    %v245 = vpack.c.b16 %v185, %v183
    %v246 = vpack.c.b16 %v186, %v184
    %v247 = vpack.c.b16 %v189, %v187
    %v248 = vpack.c.b16 %v190, %v188
    %v249 = vpack.c.b16 %v193, %v191
    %v250 = vpack.c.b16 %v194, %v192
    %v251 = vpack.c.b16 %v197, %v195
    %v252 = vpack.c.b16 %v198, %v196
    %v253 = vpack.c.b16 %v201, %v199
    %v254 = vpack.c.b16 %v202, %v200
    %v255 = vpack.c.b16 %v205, %v203
    %v256 = vpack.c.b16 %v206, %v204
    %v257 = vpack.c.b16 %v209, %v207
    %v258 = vpack.c.b16 %v210, %v208
    %v259 = vpack.c.b16 %v213, %v211
    %v260 = vpack.c.b16 %v214, %v212
    %v261 = vpack.c.b16 %v217, %v215
    %v262 = vpack.c.b16 %v218, %v216
    %v263 = vpack.c.b16 %v221, %v219
    %v264 = vpack.c.b16 %v222, %v220
    %v265 = vpack.c.b16 %v225, %v223
    %v266 = vpack.c.b16 %v226, %v224
    %v267 = vpack.c.b16 %v229, %v227
    %v268 = vpack.c.b16 %v230, %v228
    %vm305 = vcmask 359424
    %v307 = vsel %vm305, %v66, 0
    %vm309 = vcmask 1045504
    %v311 = vsel %vm309, %v267, 0
    %v314 = vsel %vm309, %v268, 0
    %316 = vmatprep.subr.bf16.mxu0 %v232
    %317 = vmatpush1.bf16.msra.mxu0 %v231
    %318 = vmatprep.subr.bf16.mxu0 %v234
    %319 = vmatpush1.bf16.msra.mxu0 %v233
    %320 = vmatprep.subr.bf16.mxu0 %v236
    %321 = vmatpush1.bf16.msra.mxu0 %v235
    %322 = vmatprep.subr.bf16.mxu0 %v238
    %323 = vmatpush1.bf16.msra.mxu0 %v237
    %324 = vmatprep.subr.bf16.mxu0 %v240
    %325 = vmatpush1.bf16.msra.mxu0 %v239
    %326 = vmatprep.subr.bf16.mxu0 %v242
    %327 = vmatpush1.bf16.msra.mxu0 %v241
    %328 = vmatprep.subr.bf16.mxu0 %v244
    %329 = vmatpush1.bf16.msra.mxu0 %v243
    %330 = vmatprep.subr.bf16.mxu0 %v246
    %331 = vmatpush1.bf16.msra.mxu0 %v245
    %332 = vmatprep.subr.bf16.mxu0 %v248
    %333 = vmatpush1.bf16.msra.mxu0 %v247
    %334 = vmatprep.subr.bf16.mxu0 %v250
    %335 = vmatpush1.bf16.msra.mxu0 %v249
    %336 = vmatprep.subr.bf16.mxu0 %v252
    %337 = vmatpush1.bf16.msra.mxu0 %v251
    %338 = vmatprep.subr.bf16.mxu0 %v254
    %339 = vmatpush1.bf16.msra.mxu0 %v253
    %340 = vmatprep.subr.bf16.mxu0 %v256
    %341 = vmatpush1.bf16.msra.mxu0 %v255
    %342 = vmatprep.subr.bf16.mxu0 %v258
    %343 = vmatpush1.bf16.msra.mxu0 %v257
    %344 = vmatprep.subr.bf16.mxu0 %v260
    %345 = vmatpush1.bf16.msra.mxu0 %v259
    %346 = vmatprep.subr.bf16.mxu0 %v262
    %347 = vmatpush1.bf16.msra.mxu0 %v261
    %348 = vmatprep.mubr.bf16.mxu0 %v65
    %349 = vmatmul.mubr.bf16.gmra.mrb[0].mxu0 %v64
    %v350 = vpop.f32.mrb[0].mxu0
    %v351 = vadd.f32 %v110, %v350
    %v352 = vpop.f32.mrb[0].mxu0
    %v353 = vadd.f32 %v114, %v352
    %v354 = vpop.f32.mrb[0].mxu0
    %v355 = vpop.f32.mrb[0].mxu0
    %356 = vdwg.mxu0
    %357 = vmatprep.subr.bf16.mxu0 %v264
    %358 = vmatpush1.bf16.msra.mxu0 %v263
    %359 = vmatprep.subr.bf16.mxu0 %v266
    %360 = vmatpush1.bf16.msra.mxu0 %v265
    %361 = vmatprep.subr.bf16.mxu0 %v314
    %362 = vmatpush1.bf16.msra.mxu0 %v311
    %363 = vmatprep.subr.bf16.mxu0 0
    %364 = vmatpush1.bf16.msra.mxu0 0
    %365 = vmatprep.subr.bf16.mxu0 0
    %366 = vmatpush1.bf16.msra.mxu0 0
    %367 = vmatprep.subr.bf16.mxu0 0
    %368 = vmatpush1.bf16.msra.mxu0 0
    %369 = vmatprep.subr.bf16.mxu0 0
    %370 = vmatpush1.bf16.msra.mxu0 0
    %371 = vmatprep.subr.bf16.mxu0 0
    %372 = vmatpush1.bf16.msra.mxu0 0
    %373 = vmatprep.subr.bf16.mxu0 0
    %374 = vmatpush1.bf16.msra.mxu0 0
    %375 = vmatprep.subr.bf16.mxu0 0
    %376 = vmatpush1.bf16.msra.mxu0 0
    %377 = vmatprep.subr.bf16.mxu0 0
    %378 = vmatpush1.bf16.msra.mxu0 0
    %379 = vmatprep.subr.bf16.mxu0 0
    %380 = vmatpush1.bf16.msra.mxu0 0
    %381 = vmatprep.subr.bf16.mxu0 0
    %382 = vmatpush1.bf16.msra.mxu0 0
    %383 = vmatprep.subr.bf16.mxu0 0
    %384 = vmatpush1.bf16.msra.mxu0 0
    %385 = vmatprep.subr.bf16.mxu0 0
    %386 = vmatpush1.bf16.msra.mxu0 0
    %387 = vmatprep.subr.bf16.mxu0 0
    %388 = vmatpush1.bf16.msra.mxu0 0
    %389 = vmatprep.mubr.bf16.mxu0 0
    %390 = vmatmul.mubr.bf16.gmra.mrb[0].mxu0 %v307
    %v391 = vpop.f32.mrb[0].mxu0
    %v392 = vadd.f32 %v351, %v391
    %v393 = vpop.f32.mrb[0].mxu0
    %v394 = vadd.f32 %v353, %v393
    %v395 = vpop.f32.mrb[0].mxu0
    %v396 = vpop.f32.mrb[0].mxu0
    %397 = vdwg.mxu0
    %v398 = vmax.f32 %v392, 0.0
    %v399 = vmax.f32 %v394, 0.0
    %v400 = vpack.c.bf16 %v398, %v398
    %v401 = vpack.c.bf16 %v399, %v399
    %v402 = vld [vmem:[#allocation7] sm:$0xf]
    %v403 = vld [vmem:[#allocation7 + $0x4] sm:$0xf]
    %v404 = vld [vmem:[#allocation7 + $0x8] sm:$0xf]
    %v405 = vld [vmem:[#allocation7 + $0xc] sm:$0xf]
    %v406 = vld [vmem:[#allocation7 + $0x10] sm:$0xf]
    %v407 = vld [vmem:[#allocation7 + $0x14] sm:$0xf]
    %v408 = vld [vmem:[#allocation7 + $0x18] sm:$0xf]
    %v409 = vld [vmem:[#allocation7 + $0x1c] sm:$0xf]
    %v410 = vld [vmem:[#allocation7 + $0x20] sm:$0xf]
    %v411 = vld [vmem:[#allocation7 + $0x24] sm:$0xf]
    %v412 = vld [vmem:[#allocation7 + $0x28] sm:$0xf]
    %v413 = vld [vmem:[#allocation7 + $0x2c] sm:$0xf]
    %v414 = vld [vmem:[#allocation7 + $0x30] sm:$0xf]
    %v415 = vld [vmem:[#allocation7 + $0x34] sm:$0xf]
    %v416 = vld [vmem:[#allocation7 + $0x38] sm:$0xf]
    %v417 = vld [vmem:[#allocation7 + $0x3c] sm:$0xf]
    %v418 = vld [vmem:[#allocation7 + $0x40] sm:$0xf]
    %v419 = vld [vmem:[#allocation7 + $0x44] sm:$0xf]
    %v420 = vld [vmem:[#allocation7 + $0x48] sm:$0xf]
    %v421 = vld [vmem:[#allocation7 + $0x4c] sm:$0xf]
    %v422 = vld [vmem:[#allocation7 + $0x50] sm:$0xf]
    %v423 = vld [vmem:[#allocation7 + $0x54] sm:$0xf]
    %v424 = vld [vmem:[#allocation7 + $0x58] sm:$0xf]
    %v425 = vld [vmem:[#allocation7 + $0x5c] sm:$0xf]
    %v426 = vld [vmem:[#allocation7 + $0x60] sm:$0xf]
    %v427 = vld [vmem:[#allocation7 + $0x64] sm:$0xf]
    %v428 = vld [vmem:[#allocation7 + $0x68] sm:$0xf]
    %v429 = vld [vmem:[#allocation7 + $0x6c] sm:$0xf]
    %v430 = vld [vmem:[#allocation7 + $0x70] sm:$0xf]
    %v431 = vld [vmem:[#allocation7 + $0x74] sm:$0xf]
    %v432 = vld [vmem:[#allocation7 + $0x78] sm:$0xf]
    %v433 = vld [vmem:[#allocation7 + $0x7c] sm:$0xf]
    %v434 = vld [vmem:[%s4] sm:$0x1]
    %v436 = vlaneseq
    %v437 = vshrl.u32 %v436, 7
    %v438 = vsub.s32 0, %v437
    %v439 = vrot.slane %v434, %v438
    %v473 = vunpack.c.l.b16 %v402
    %v474 = vunpack.c.l.b16 %v403
    %v475 = vunpack.c.l.b16 %v404
    %v476 = vunpack.c.l.b16 %v405
    %v477 = vunpack.c.l.b16 %v406
    %v478 = vunpack.c.l.b16 %v407
    %v479 = vunpack.c.l.b16 %v408
    %v480 = vunpack.c.l.b16 %v409
    %v481 = vunpack.c.l.b16 %v410
    %v482 = vunpack.c.l.b16 %v411
    %v483 = vunpack.c.l.b16 %v412
    %v484 = vunpack.c.l.b16 %v413
    %v485 = vunpack.c.l.b16 %v414
    %v486 = vunpack.c.l.b16 %v415
    %v487 = vunpack.c.l.b16 %v416
    %v488 = vunpack.c.l.b16 %v417
    %v489 = vunpack.c.l.b16 %v418
    %v490 = vunpack.c.l.b16 %v419
    %v491 = vunpack.c.l.b16 %v420
    %v492 = vunpack.c.l.b16 %v421
    %v493 = vunpack.c.l.b16 %v422
    %v494 = vunpack.c.l.b16 %v423
    %v495 = vunpack.c.l.b16 %v424
    %v496 = vunpack.c.l.b16 %v425
    %v497 = vunpack.c.l.b16 %v426
    %v498 = vunpack.c.l.b16 %v427
    %v499 = vunpack.c.l.b16 %v428
    %v500 = vunpack.c.l.b16 %v429
    %v501 = vunpack.c.l.b16 %v430
    %v502 = vunpack.c.l.b16 %v431
    %v503 = vunpack.c.l.b16 %v432
    %v504 = vunpack.c.l.b16 %v433
    %v505 = vpack.c.b16 %v474, %v473
    %v506 = vpack.c.b16 %v476, %v475
    %v507 = vpack.c.b16 %v478, %v477
    %v508 = vpack.c.b16 %v480, %v479
    %v509 = vpack.c.b16 %v482, %v481
    %v510 = vpack.c.b16 %v484, %v483
    %v511 = vpack.c.b16 %v486, %v485
    %v512 = vpack.c.b16 %v488, %v487
    %v513 = vpack.c.b16 %v490, %v489
    %v514 = vpack.c.b16 %v492, %v491
    %v515 = vpack.c.b16 %v494, %v493
    %v516 = vpack.c.b16 %v496, %v495
    %v517 = vpack.c.b16 %v498, %v497
    %v518 = vpack.c.b16 %v500, %v499
    %v519 = vpack.c.b16 %v502, %v501
    %v520 = vpack.c.b16 %v504, %v503
    %537 = vmatprep.subr.bf16.mxu0 0
    %538 = vmatpush1.bf16.msra.mxu0 %v505
    %539 = vmatprep.subr.bf16.mxu0 0
    %540 = vmatpush1.bf16.msra.mxu0 %v506
    %541 = vmatprep.subr.bf16.mxu0 0
    %542 = vmatpush1.bf16.msra.mxu0 %v507
    %543 = vmatprep.subr.bf16.mxu0 0
    %544 = vmatpush1.bf16.msra.mxu0 %v508
    %545 = vmatprep.subr.bf16.mxu0 0
    %546 = vmatpush1.bf16.msra.mxu0 %v509
    %547 = vmatprep.subr.bf16.mxu0 0
    %548 = vmatpush1.bf16.msra.mxu0 %v510
    %549 = vmatprep.subr.bf16.mxu0 0
    %550 = vmatpush1.bf16.msra.mxu0 %v511
    %551 = vmatprep.subr.bf16.mxu0 0
    %552 = vmatpush1.bf16.msra.mxu0 %v512
    %553 = vmatprep.subr.bf16.mxu0 0
    %554 = vmatpush1.bf16.msra.mxu0 %v513
    %555 = vmatprep.subr.bf16.mxu0 0
    %556 = vmatpush1.bf16.msra.mxu0 %v514
    %557 = vmatprep.subr.bf16.mxu0 0
    %558 = vmatpush1.bf16.msra.mxu0 %v515
    %559 = vmatprep.subr.bf16.mxu0 0
    %560 = vmatpush1.bf16.msra.mxu0 %v516
    %561 = vmatprep.subr.bf16.mxu0 0
    %562 = vmatpush1.bf16.msra.mxu0 %v517
    %563 = vmatprep.subr.bf16.mxu0 0
    %564 = vmatpush1.bf16.msra.mxu0 %v518
    %565 = vmatprep.subr.bf16.mxu0 0
    %566 = vmatpush1.bf16.msra.mxu0 %v519
    %567 = vmatprep.subr.bf16.mxu0 0
    %568 = vmatpush1.bf16.msra.mxu0 %v520
    %569 = vmatprep.mubr.bf16.mxu0 %v401
    %570 = vmatmul.mubr.bf16.gmra.mrb[0].mxu0 %v400
    %v571 = vpop.f32.mrb[0].mxu0
    %v572 = vadd.f32 %v439, %v571
    %v573 = vpop.f32.mrb[0].mxu0
    %v574 = vpop.f32.mrb[0].mxu0
    %v575 = vpop.f32.mrb[0].mxu0
    %576 = vdwg.mxu0
    %577 = vst [vmem:[#allocation8] sm:$0xff] %v572
    // Predicated region
    $region34: #{base_network_forward.1} parent=1 // pred_check
      _
    $region35: #{base_network_forward.1} parent=1 // pred_check_branch
      %579 = sbr.rel (0) target = $region37
    $region36: #{base_network_forward.1} parent=1 // pred_region
      %s581 = ssub.s32 128, 128
      %582 = vsyncadd [#allocation4], %s581
      %s584 = sshll.u32 [#allocation8], 4
      %s585 = int_to_ptr.vmem [resolvable:$true] %s584
      %587 = dma.vmem_to_hbm [thread:$0]  %s585, 128, %s5, [#allocation4]
    $region37: #{base_network_forward.1} parent=1 // pred_fallthru
      _
    // Predicated region
    $region38: #{base_network_forward.1} parent=1 // pred_check
      _
    $region39: #{base_network_forward.1} parent=1 // pred_check_branch
      %589 = sbr.rel (0) target = $region41
    $region40: #{base_network_forward.1} parent=1 // pred_region
      %590 = dma.done [#allocation4], 128
    $region41: #{base_network_forward.1} parent=1 // pred_fallthru
      _
    %591 = vsyncpa [#allocation3], 1
    %592 = vsyncpa [#allocation6], 1
    %593 = vsyncpa [#allocation4], 1

</llo_original>
